<compile_context>
chip_gen: v6e
topology: v6e:2x2x1
jax: 0.10.0
libtpu: 0.0.40
codegen_flags: <defaults>
</compile_context>

<pallas_src>
import functools

import jax
import jax.numpy as jnp
from jax.experimental import pallas as pl
from jax.experimental.pallas import tpu as pltpu

_LANES = 128
_SUBLANES = 8
_MAX_TILE_B = 1024  # intermediates are VMEM temporaries; 1024x128 f32 ~ 0.5 MB


def _round_up(n, m):
    return ((n + m - 1) // m) * m


def _cdiv(a, b):
    return -(-a // b)


def _mlp_kernel(x_ref, w1_ref, b1_ref, w2_ref, b2_ref, w3_ref, b3_ref, o_ref):
    # Layer 1: Linear(D -> H1p) + ReLU (MXU dot, f32 accumulation).
    h1 = jnp.dot(x_ref[...], w1_ref[...], preferred_element_type=jnp.float32)
    h1 = jnp.maximum(h1 + b1_ref[...], 0.0)
    # (Dropout -> identity at inference.)

    # Layer 2: Linear(H1p -> H2p) + ReLU.
    h2 = jnp.dot(h1.astype(w2_ref.dtype), w2_ref[...],
                 preferred_element_type=jnp.float32)
    h2 = jnp.maximum(h2 + b2_ref[...], 0.0)

    # Layer 3: Linear(H2p -> Cp). Class dim is lane-padded to a multiple of 128
    # at prep time, so this store is dense (no vst.msk partial stores).
    out = jnp.dot(h2.astype(w3_ref.dtype), w3_ref[...],
                  preferred_element_type=jnp.float32)
    o_ref[...] = (out + b3_ref[...]).astype(o_ref.dtype)


def prepare_params(w1, b1, w2, b2, w3, b3, *, operand_dtype=None,
                   pad_hidden=True):
    """One-time parameter prep (hoisted out of the per-call path).

    * Biases reshaped to (1, H) rows.
    * Hidden dims and the class dim zero-padded up to multiples of 128 lanes
      (exact: ReLU(0)=0 and zero weight rows/cols contribute nothing).
    * Optional bf16 cast of the weight matrices (biases stay f32; the kernel
      accumulates in f32 via preferred_element_type). Recommended on v6e/v7x;
      keep f32 on v5e.
    """
    D, H1 = w1.shape
    H2 = w2.shape[1]
    C = w3.shape[1]

    b1 = jnp.asarray(b1).reshape(1, H1)
    b2 = jnp.asarray(b2).reshape(1, H2)
    b3 = jnp.asarray(b3).reshape(1, C)

    H1p = _round_up(H1, _LANES) if pad_hidden else H1
    H2p = _round_up(H2, _LANES) if pad_hidden else H2
    Cp = _round_up(C, _LANES)

    w1 = jnp.pad(w1, ((0, 0), (0, H1p - H1)))
    b1 = jnp.pad(b1, ((0, 0), (0, H1p - H1)))
    w2 = jnp.pad(w2, ((0, H1p - H1), (0, H2p - H2)))
    b2 = jnp.pad(b2, ((0, 0), (0, H2p - H2)))
    w3 = jnp.pad(w3, ((0, H2p - H2), (0, Cp - C)))
    b3 = jnp.pad(b3, ((0, 0), (0, Cp - C)))

    if operand_dtype is not None:
        cdt = jnp.dtype(operand_dtype)
        w1, w2, w3 = w1.astype(cdt), w2.astype(cdt), w3.astype(cdt)

    return (w1, b1, w2, b2, w3, b3)


@functools.partial(jax.jit, static_argnames=("num_classes", "tile_b"))
def classifier_forward(x, w1, b1, w2, b2, w3, b3, *, num_classes, tile_b=None):
    """Forward pass. Weights must come from `prepare_params`."""
    B, D = x.shape
    H1 = w1.shape[1]
    H2 = w2.shape[1]
    Cp = w3.shape[1]
    out_dtype = x.dtype

    # Batch tile: >=2 parallel grid steps when the batch allows it (so both
    # v7x TensorCores get work via dimension_semantics=("parallel",)); large
    # tiles amortize the ~0.35 us per-grid-step overhead for big batches.
    if tile_b is None:
        B8 = _round_up(B, _SUBLANES)
        steps = 2 if B8 >= 2 * _SUBLANES else 1
        tile_b = min(_round_up(_cdiv(B8, steps), _SUBLANES), _MAX_TILE_B)
    else:
        tile_b = _round_up(int(tile_b), _SUBLANES)  # keep (8,128) legal

    B_pad = _round_up(B, tile_b)
    if B_pad != B:
        x = jnp.pad(x, ((0, B_pad - B), (0, 0)))
    x = x.astype(w1.dtype)  # per-call cast of activations only (weights pre-cast)

    def _nbytes(a):
        return a.size * a.dtype.itemsize

    cost = pl.CostEstimate(
        flops=2 * B_pad * (D * H1 + H1 * H2 + H2 * Cp),
        transcendentals=0,
        bytes_accessed=sum(_nbytes(a) for a in (x, w1, b1, w2, b2, w3, b3))
        + B_pad * Cp * jnp.dtype(out_dtype).itemsize,
    )

    # Grid-invariant weights/biases: single-buffered so their VMEM footprint is
    # not doubled (matters for v7x's 64 MiB VMEM once input_dim grows).
    def w_spec(shape):
        return pl.BlockSpec(shape, lambda i: (0, 0),
                            pipeline_mode=pl.Buffered(1))

    out = pl.pallas_call(
        _mlp_kernel,
        out_shape=jax.ShapeDtypeStruct((B_pad, Cp), out_dtype),
        grid=(B_pad // tile_b,),
        in_specs=[
            pl.BlockSpec((tile_b, D), lambda i: (i, 0)),  # activations: batch-tiled
            w_spec((D, H1)),
            w_spec((1, H1)),
            w_spec((H1, H2)),
            w_spec((1, H2)),
            w_spec((H2, Cp)),
            w_spec((1, Cp)),
        ],
        out_specs=pl.BlockSpec((tile_b, Cp), lambda i: (i, 0)),
        compiler_params=pltpu.CompilerParams(
            dimension_semantics=("parallel",)),
        cost_estimate=cost,
    )(x, w1, b1, w2, b2, w3, b3)

    # Slice off batch padding and the lane padding of the class dimension.
    return out[:B, :num_classes]


def _init_linear(key, fan_in, fan_out, dtype=jnp.float32):
    # Deterministic init mimicking PyTorch nn.Linear (uniform +/- 1/sqrt(fan_in)).
    kw, kb = jax.random.split(key)
    bound = 1.0 / float(fan_in) ** 0.5
    w = jax.random.uniform(kw, (fan_in, fan_out), dtype, -bound, bound)
    b = jax.random.uniform(kb, (1, fan_out), dtype, -bound, bound)
    return w, b


def _reference_forward(x, w1, b1, w2, b2, w3, b3):
    h1 = jnp.maximum(x @ w1 + b1, 0.0)
    h2 = jnp.maximum(h1 @ w2 + b2, 0.0)
    return h2 @ w3 + b3


if __name__ == "__main__":
    # Classifier(input_dim=128, num_classes=8, dropout=0.1, activation="relu")
    input_dim = 128
    num_classes = 8
    batch = 64

    key = jax.random.PRNGKey(0)
    kx, k1, k2, k3 = jax.random.split(key, 4)

    x = jax.random.normal(kx, (batch, input_dim), jnp.float32)
    w1, b1 = _init_linear(k1, input_dim, input_dim // 2)
    w2, b2 = _init_linear(k2, input_dim // 2, input_dim // 4)
    w3, b3 = _init_linear(k3, input_dim // 4, num_classes)

    ref = _reference_forward(x, w1, b1, w2, b2, w3, b3)

    # f32 path (v5e default): exact parity with the PyTorch module in eval mode.
    params_f32 = prepare_params(w1, b1, w2, b2, w3, b3)
    out = classifier_forward(x, *params_f32, num_classes=num_classes)
    out = jax.block_until_ready(out)
    assert out.shape == (batch, num_classes)
    assert jnp.allclose(out, ref, atol=1e-5, rtol=1e-5)

    # bf16-operand fast path (v6e/v7x): weights pre-cast ONCE at prep time,
    # f32 accumulation in-kernel, looser tolerance expected.
    params_bf16 = prepare_params(w1, b1, w2, b2, w3, b3,
                                 operand_dtype="bfloat16")
    out_bf16 = classifier_forward(x, *params_bf16, num_classes=num_classes)
    out_bf16 = jax.block_until_ready(out_bf16)
    assert out_bf16.shape == (batch, num_classes)
    assert jnp.allclose(out_bf16, ref, atol=2e-1, rtol=2e-1)

    print("KERNEL_OK")
</pallas_src>

<mosaic_0001>
module attributes {stable_mosaic.version = 11 : i64} {
  func.func @_mlp_kernel(%arg0: i32, %arg1: memref<32x128xf32, #tpu.memory_space<vmem>>, %arg2: memref<128x128xf32, #tpu.memory_space<vmem>>, %arg3: memref<1x128xf32, #tpu.memory_space<vmem>>, %arg4: memref<128x128xf32, #tpu.memory_space<vmem>>, %arg5: memref<1x128xf32, #tpu.memory_space<vmem>>, %arg6: memref<128x128xf32, #tpu.memory_space<vmem>>, %arg7: memref<1x128xf32, #tpu.memory_space<vmem>>, %arg8: memref<32x128xf32, #tpu.memory_space<vmem>>) attributes {dimension_semantics = [#tpu.dimension_semantics<parallel>], iteration_bounds = array<i64: 2>, scalar_prefetch = 0 : i64, scratch_operands = 0 : i64, tpu.core_type = #tpu.core_type<tc>, window_params = [{transform_indices = @transform_0, window_bounds = array<i64: 32, 128>}, {pipeline_mode = #tpu.pipeline_mode<synchronous>, transform_indices = @transform_1, window_bounds = array<i64: 128, 128>}, {pipeline_mode = #tpu.pipeline_mode<synchronous>, transform_indices = @transform_2, window_bounds = array<i64: 1, 128>}, {pipeline_mode = #tpu.pipeline_mode<synchronous>, transform_indices = @transform_3, window_bounds = array<i64: 128, 128>}, {pipeline_mode = #tpu.pipeline_mode<synchronous>, transform_indices = @transform_4, window_bounds = array<i64: 1, 128>}, {pipeline_mode = #tpu.pipeline_mode<synchronous>, transform_indices = @transform_5, window_bounds = array<i64: 128, 128>}, {pipeline_mode = #tpu.pipeline_mode<synchronous>, transform_indices = @transform_6, window_bounds = array<i64: 1, 128>}, {transform_indices = @transform_7, window_bounds = array<i64: 32, 128>}]} {
    %c0 = arith.constant 0 : index
    %c0_0 = arith.constant 0 : index
    %0 = vector.load %arg1[%c0, %c0_0] : memref<32x128xf32, #tpu.memory_space<vmem>>, vector<32x128xf32>
    %c0_1 = arith.constant 0 : index
    %c0_2 = arith.constant 0 : index
    %1 = vector.load %arg2[%c0_1, %c0_2] : memref<128x128xf32, #tpu.memory_space<vmem>>, vector<128x128xf32>
    %cst = arith.constant dense<0.000000e+00> : vector<32x128xf32>
    %2 = tpu.matmul %0, %1, %cst {dimension_numbers = #tpu.dot_dimension_numbers<[1], [0], [0], [1], [0, 0, 1, 1], [], []>} : vector<32x128xf32>, vector<128x128xf32>, vector<32x128xf32> -> vector<32x128xf32>
    %c0_3 = arith.constant 0 : index
    %c0_4 = arith.constant 0 : index
    %3 = vector.load %arg3[%c0_3, %c0_4] : memref<1x128xf32, #tpu.memory_space<vmem>>, vector<1x128xf32>
    %4 = vector.broadcast %3 : vector<1x128xf32> to vector<32x128xf32>
    %5 = arith.addf %2, %4 : vector<32x128xf32>
    %cst_5 = arith.constant 0.000000e+00 : f32
    %6 = vector.broadcast %cst_5 : f32 to vector<32x128xf32>
    %7 = arith.maximumf %5, %6 : vector<32x128xf32>
    %c0_6 = arith.constant 0 : index
    %c0_7 = arith.constant 0 : index
    %8 = vector.load %arg4[%c0_6, %c0_7] : memref<128x128xf32, #tpu.memory_space<vmem>>, vector<128x128xf32>
    %cst_8 = arith.constant dense<0.000000e+00> : vector<32x128xf32>
    %9 = tpu.matmul %7, %8, %cst_8 {dimension_numbers = #tpu.dot_dimension_numbers<[1], [0], [0], [1], [0, 0, 1, 1], [], []>} : vector<32x128xf32>, vector<128x128xf32>, vector<32x128xf32> -> vector<32x128xf32>
    %c0_9 = arith.constant 0 : index
    %c0_10 = arith.constant 0 : index
    %10 = vector.load %arg5[%c0_9, %c0_10] : memref<1x128xf32, #tpu.memory_space<vmem>>, vector<1x128xf32>
    %11 = vector.broadcast %10 : vector<1x128xf32> to vector<32x128xf32>
    %12 = arith.addf %9, %11 : vector<32x128xf32>
    %cst_11 = arith.constant 0.000000e+00 : f32
    %13 = vector.broadcast %cst_11 : f32 to vector<32x128xf32>
    %14 = arith.maximumf %12, %13 : vector<32x128xf32>
    %c0_12 = arith.constant 0 : index
    %c0_13 = arith.constant 0 : index
    %15 = vector.load %arg6[%c0_12, %c0_13] : memref<128x128xf32, #tpu.memory_space<vmem>>, vector<128x128xf32>
    %cst_14 = arith.constant dense<0.000000e+00> : vector<32x128xf32>
    %16 = tpu.matmul %14, %15, %cst_14 {dimension_numbers = #tpu.dot_dimension_numbers<[1], [0], [0], [1], [0, 0, 1, 1], [], []>} : vector<32x128xf32>, vector<128x128xf32>, vector<32x128xf32> -> vector<32x128xf32>
    %c0_15 = arith.constant 0 : index
    %c0_16 = arith.constant 0 : index
    %17 = vector.load %arg7[%c0_15, %c0_16] : memref<1x128xf32, #tpu.memory_space<vmem>>, vector<1x128xf32>
    %18 = vector.broadcast %17 : vector<1x128xf32> to vector<32x128xf32>
    %19 = arith.addf %16, %18 : vector<32x128xf32>
    %c0_17 = arith.constant 0 : index
    %c0_18 = arith.constant 0 : index
    %20 = vector.load %arg8[%c0_17, %c0_18] : memref<32x128xf32, #tpu.memory_space<vmem>>, vector<32x128xf32>
    tpu.vector_store %arg8[%c0_17, %c0_18], %19 {strides = array<i32>} : memref<32x128xf32, #tpu.memory_space<vmem>>, vector<32x128xf32>,
    return
  }
  func.func @transform_0(%arg0: i32) -> (i32, i32) {
    %c0_i32 = arith.constant 0 : i32
    %c0_i32_0 = arith.constant 0 : i32
    return %arg0, %c0_i32 : i32, i32
  }
  func.func @transform_1(%arg0: i32) -> (i32, i32) {
    %c0_i32 = arith.constant 0 : i32
    %c0_i32_0 = arith.constant 0 : i32
    %c0_i32_1 = arith.constant 0 : i32
    return %c0_i32, %c0_i32_0 : i32, i32
  }
  func.func @transform_2(%arg0: i32) -> (i32, i32) {
    %c0_i32 = arith.constant 0 : i32
    %c0_i32_0 = arith.constant 0 : i32
    %c0_i32_1 = arith.constant 0 : i32
    return %c0_i32, %c0_i32_0 : i32, i32
  }
  func.func @transform_3(%arg0: i32) -> (i32, i32) {
    %c0_i32 = arith.constant 0 : i32
    %c0_i32_0 = arith.constant 0 : i32
    %c0_i32_1 = arith.constant 0 : i32
    return %c0_i32, %c0_i32_0 : i32, i32
  }
  func.func @transform_4(%arg0: i32) -> (i32, i32) {
    %c0_i32 = arith.constant 0 : i32
    %c0_i32_0 = arith.constant 0 : i32
    %c0_i32_1 = arith.constant 0 : i32
    return %c0_i32, %c0_i32_0 : i32, i32
  }
  func.func @transform_5(%arg0: i32) -> (i32, i32) {
    %c0_i32 = arith.constant 0 : i32
    %c0_i32_0 = arith.constant 0 : i32
    %c0_i32_1 = arith.constant 0 : i32
    return %c0_i32, %c0_i32_0 : i32, i32
  }
  func.func @transform_6(%arg0: i32) -> (i32, i32) {
    %c0_i32 = arith.constant 0 : i32
    %c0_i32_0 = arith.constant 0 : i32
    %c0_i32_1 = arith.constant 0 : i32
    return %c0_i32, %c0_i32_0 : i32, i32
  }
  func.func @transform_7(%arg0: i32) -> (i32, i32) {
    %c0_i32 = arith.constant 0 : i32
    %c0_i32_0 = arith.constant 0 : i32
    return %arg0, %c0_i32 : i32, i32
  }
}

</mosaic_0001>

<llo_original>
// kernel: classifier_forward.1
$region0: #{classifier_forward.1}
  #allocation0 [shape = 'u32[]', space=smem, size = 0x4, offset = 0x4, fixed_abs, tag = 'smem constant byte address 0x4 - core index']
  #allocation1 [shape = 'u32[144,128]{1,0:T(1,128)}', space=vmem, size = 0x12000, scoped, tag = 'internal scratch']
  %s0 = inlined_call_operand.hbm [shape: f32[64,128], index: 0, kind: input, shape index: {}]
  %s1 = inlined_call_operand.hbm [shape: f32[128,128], index: 1, kind: input, shape index: {}]
  %s2 = inlined_call_operand.vmem [shape: f32[1,128], index: 2, kind: input, shape index: {}]
  %s3 = inlined_call_operand.hbm [shape: f32[128,128], index: 3, kind: input, shape index: {}]
  %s4 = inlined_call_operand.vmem [shape: f32[1,128], index: 4, kind: input, shape index: {}]
  %s5 = inlined_call_operand.hbm [shape: f32[128,128], index: 5, kind: input, shape index: {}]
  %s6 = inlined_call_operand.vmem [shape: f32[1,128], index: 6, kind: input, shape index: {}]
  %s7 = inlined_call_operand.vmem [shape: f32[64,128], index: 7, kind: output, shape index: {}]
  %s8 = sld [smem:[#allocation0]]
  $region77: #{classifier_forward.1} parent=0
    _
  %s10 = ssub.s32 1, %s8
  %s11 = scalar_select 0, %s10, %s8
  $region1: #{classifier_forward.1} parent=0
    #allocation2 [shape = 'u8[32768]{0}', space=vmem, size = 0x8000, scoped, tag = 'input window, operand 0']
    #allocation3 [shape = 's32[2]{0}', space=sflag, size = 0x8, scoped, tag = 'scoped memory for classifier_forward.1']
    #allocation4 [shape = 'u8[65536]{0}', space=vmem, size = 0x10000, scoped, tag = 'input window, operand 1, single buffered']
    #allocation5 [shape = 's32[1]{0}', space=sflag, size = 0x4, scoped, tag = 'scoped memory for classifier_forward.1']
    #allocation6 [shape = 'u8[65536]{0}', space=vmem, size = 0x10000, scoped, tag = 'input window, operand 3, single buffered']
    #allocation7 [shape = 'u8[65536]{0}', space=vmem, size = 0x10000, scoped, tag = 'input window, operand 5, single buffered']
    #allocation8 [shape = 's32[1]{0}', space=sflag, size = 0x4, scoped, tag = 'scoped memory for classifier_forward.1']
    %12 = vsyncpa [#allocation3], 0
    %s13 = scalar_lea.sflag [#allocation3], 1
    %14 = vsyncpa %s13, 0
    %15 = vsyncpa [#allocation5], 0
    %16 = vsyncpa [#allocation8], 0
    loop: start=0, step=1, limit=4
    $region2: #{classifier_forward.1} parent=1 // loop_pre_header
      _
    $region3: #{classifier_forward.1} parent=1 // loop_header
      %s18 = sphi 0, %s22
      %p19 = scmp.ge.s32.totalorder %s18, 4
      %s28 = sphi 0, %s30
      %s31 = sphi 0, %s28
      %s32 = sphi 0, %s31
      %s48 = sphi 0, %s32
      %s52 = sphi 0, %s52
      %s54 = sphi 0, %s52
      %s55 = sphi 0, %s54
      %s69 = sphi 0, %s55
      %s73 = sphi 0, %s73
      %s75 = sphi 0, %s73
      %s76 = sphi 0, %s75
      %s90 = sphi 0, %s76
      %s94 = sphi 0, %s94
      %s96 = sphi 0, %s94
      %s97 = sphi 0, %s96
      %s111 = sphi 0, %s97
      %s115 = sphi 0, %s115
      %s117 = sphi 0, %s115
      %s118 = sphi 0, %s117
      %s132 = sphi 0, %s118
      %s136 = sphi 0, %s136
      %s138 = sphi 0, %s136
      %s139 = sphi 0, %s138
      %s153 = sphi 0, %s139
      %s157 = sphi 0, %s157
      %s159 = sphi 0, %s157
      %s160 = sphi 0, %s159
      %s174 = sphi 0, %s160
      %s180 = sphi 0, %s182
      %s183 = sphi 0, %s180
      %s184 = sphi 0, %s183
      %s200 = sphi 0, %s184
    $region4: #{classifier_forward.1} parent=1 // loop_header_branch
      %21 = sbr.rel (%p19) target = $region8
    $region5: #{classifier_forward.1} parent=1 // loop_body
      %s23 = ssub.s32 %s18, 1
      %s24 = ssub.s32 %s18, 2
      %s25 = sadd.s32 %s18, 1
      %s26 = ssub.s32 %s18, %s25
      %p27 = scmp.eq.s32.totalorder %s26, 0
      %s29 = sadd.s32 %s28, 1
      %s30 = scalar_select %p27, %s28, %s29
      %p33 = pneg %p27
      %p34 = scmp.eq.s32.totalorder %s18, 1
      %p35 = por %p33, %p34
      %p36 = scmp.ne.s32.totalorder %s28, %s31
      %p37 = scmp.eq.s32.totalorder %s18, 0
      %p38 = por %p36, %p37
      %p39 = scmp.ne.s32.totalorder %s28, %s31
      %p40 = scmp.eq.s32.totalorder %s23, 1
      %p41 = por %p39, %p40
      %p42 = scmp.ne.s32.totalorder %s31, %s32
      %p43 = scmp.eq.s32.totalorder %s23, 0
      %p44 = por %p42, %p43
      %p45 = scmp.ne.s32.totalorder %s31, %s32
      %p46 = scmp.eq.s32.totalorder %s24, 1
      %p47 = por %p45, %p46
      %p49 = scmp.ne.s32.totalorder %s32, %s48
      %p50 = scmp.eq.s32.totalorder %s24, 0
      %p51 = por %p49, %p50
      %s53 = sadd.s32 %s52, 1
      %p56 = scmp.eq.s32.totalorder %s18, 1
      %p57 = scmp.ne.s32.totalorder %s52, %s54
      %p58 = scmp.eq.s32.totalorder %s18, 0
      %p59 = por %p57, %p58
      %p60 = scmp.ne.s32.totalorder %s52, %s54
      %p61 = scmp.eq.s32.totalorder %s23, 1
      %p62 = por %p60, %p61
      %p63 = scmp.ne.s32.totalorder %s54, %s55
      %p64 = scmp.eq.s32.totalorder %s23, 0
      %p65 = por %p63, %p64
      %p66 = scmp.ne.s32.totalorder %s54, %s55
      %p67 = scmp.eq.s32.totalorder %s24, 1
      %p68 = por %p66, %p67
      %p70 = scmp.ne.s32.totalorder %s55, %s69
      %p71 = scmp.eq.s32.totalorder %s24, 0
      %p72 = por %p70, %p71
      %s74 = sadd.s32 %s73, 1
      %p77 = scmp.eq.s32.totalorder %s18, 1
      %p78 = scmp.ne.s32.totalorder %s73, %s75
      %p79 = scmp.eq.s32.totalorder %s18, 0
      %p80 = por %p78, %p79
      %p81 = scmp.ne.s32.totalorder %s73, %s75
      %p82 = scmp.eq.s32.totalorder %s23, 1
      %p83 = por %p81, %p82
      %p84 = scmp.ne.s32.totalorder %s75, %s76
      %p85 = scmp.eq.s32.totalorder %s23, 0
      %p86 = por %p84, %p85
      %p87 = scmp.ne.s32.totalorder %s75, %s76
      %p88 = scmp.eq.s32.totalorder %s24, 1
      %p89 = por %p87, %p88
      %p91 = scmp.ne.s32.totalorder %s76, %s90
      %p92 = scmp.eq.s32.totalorder %s24, 0
      %p93 = por %p91, %p92
      %s95 = sadd.s32 %s94, 1
      %p98 = scmp.eq.s32.totalorder %s18, 1
      %p99 = scmp.ne.s32.totalorder %s94, %s96
      %p100 = scmp.eq.s32.totalorder %s18, 0
      %p101 = por %p99, %p100
      %p102 = scmp.ne.s32.totalorder %s94, %s96
      %p103 = scmp.eq.s32.totalorder %s23, 1
      %p104 = por %p102, %p103
      %p105 = scmp.ne.s32.totalorder %s96, %s97
      %p106 = scmp.eq.s32.totalorder %s23, 0
      %p107 = por %p105, %p106
      %p108 = scmp.ne.s32.totalorder %s96, %s97
      %p109 = scmp.eq.s32.totalorder %s24, 1
      %p110 = por %p108, %p109
      %p112 = scmp.ne.s32.totalorder %s97, %s111
      %p113 = scmp.eq.s32.totalorder %s24, 0
      %p114 = por %p112, %p113
      %s116 = sadd.s32 %s115, 1
      %p119 = scmp.eq.s32.totalorder %s18, 1
      %p120 = scmp.ne.s32.totalorder %s115, %s117
      %p121 = scmp.eq.s32.totalorder %s18, 0
      %p122 = por %p120, %p121
      %p123 = scmp.ne.s32.totalorder %s115, %s117
      %p124 = scmp.eq.s32.totalorder %s23, 1
      %p125 = por %p123, %p124
      %p126 = scmp.ne.s32.totalorder %s117, %s118
      %p127 = scmp.eq.s32.totalorder %s23, 0
      %p128 = por %p126, %p127
      %p129 = scmp.ne.s32.totalorder %s117, %s118
      %p130 = scmp.eq.s32.totalorder %s24, 1
      %p131 = por %p129, %p130
      %p133 = scmp.ne.s32.totalorder %s118, %s132
      %p134 = scmp.eq.s32.totalorder %s24, 0
      %p135 = por %p133, %p134
      %s137 = sadd.s32 %s136, 1
      %p140 = scmp.eq.s32.totalorder %s18, 1
      %p141 = scmp.ne.s32.totalorder %s136, %s138
      %p142 = scmp.eq.s32.totalorder %s18, 0
      %p143 = por %p141, %p142
      %p144 = scmp.ne.s32.totalorder %s136, %s138
      %p145 = scmp.eq.s32.totalorder %s23, 1
      %p146 = por %p144, %p145
      %p147 = scmp.ne.s32.totalorder %s138, %s139
      %p148 = scmp.eq.s32.totalorder %s23, 0
      %p149 = por %p147, %p148
      %p150 = scmp.ne.s32.totalorder %s138, %s139
      %p151 = scmp.eq.s32.totalorder %s24, 1
      %p152 = por %p150, %p151
      %p154 = scmp.ne.s32.totalorder %s139, %s153
      %p155 = scmp.eq.s32.totalorder %s24, 0
      %p156 = por %p154, %p155
      %s158 = sadd.s32 %s157, 1
      %p161 = scmp.eq.s32.totalorder %s18, 1
      %p162 = scmp.ne.s32.totalorder %s157, %s159
      %p163 = scmp.eq.s32.totalorder %s18, 0
      %p164 = por %p162, %p163
      %p165 = scmp.ne.s32.totalorder %s157, %s159
      %p166 = scmp.eq.s32.totalorder %s23, 1
      %p167 = por %p165, %p166
      %p168 = scmp.ne.s32.totalorder %s159, %s160
      %p169 = scmp.eq.s32.totalorder %s23, 0
      %p170 = por %p168, %p169
      %p171 = scmp.ne.s32.totalorder %s159, %s160
      %p172 = scmp.eq.s32.totalorder %s24, 1
      %p173 = por %p171, %p172
      %p175 = scmp.ne.s32.totalorder %s160, %s174
      %p176 = scmp.eq.s32.totalorder %s24, 0
      %p177 = por %p175, %p176
      %s178 = ssub.s32 %s18, %s25
      %p179 = scmp.eq.s32.totalorder %s178, 0
      %s181 = sadd.s32 %s180, 1
      %s182 = scalar_select %p179, %s180, %s181
      %p185 = pneg %p179
      %p186 = scmp.eq.s32.totalorder %s18, 1
      %p187 = por %p185, %p186
      %p188 = scmp.ne.s32.totalorder %s180, %s183
      %p189 = scmp.eq.s32.totalorder %s18, 0
      %p190 = por %p188, %p189
      %p191 = scmp.ne.s32.totalorder %s180, %s183
      %p192 = scmp.eq.s32.totalorder %s23, 1
      %p193 = por %p191, %p192
      %p194 = scmp.ne.s32.totalorder %s183, %s184
      %p195 = scmp.eq.s32.totalorder %s23, 0
      %p196 = por %p194, %p195
      %p197 = scmp.ne.s32.totalorder %s183, %s184
      %p198 = scmp.eq.s32.totalorder %s24, 1
      %p199 = por %p197, %p198
      %p201 = scmp.ne.s32.totalorder %s184, %s200
      %p202 = scmp.eq.s32.totalorder %s24, 0
      %p203 = por %p201, %p202
      %p204 = scmp.le.s32.totalorder 1, %s18
      %p205 = scmp.lt.s32.totalorder %s18, 3
      %p206 = pnand %p204, %p205
      %p207 = pneg %p206
      // Predicated region
      $region9: #{classifier_forward.1} parent=5 // pred_check
        _
      $region10: #{classifier_forward.1} parent=5 // pred_check_branch
        %209 = sbr.rel (%p206) target = $region12
      $region11: #{classifier_forward.1} parent=5 // pred_region
        %s210 = ssub.s32 %s18, 1
        // Predicated region
        $region13: #{classifier_forward.1} parent=11 // pred_check
          %p211 = pneg %p65
        $region14: #{classifier_forward.1} parent=11 // pred_check_branch
          %213 = sbr.rel (%p211) target = $region16
        $region15: #{classifier_forward.1} parent=11 // pred_region
          %s215 = ssub.s32 2048, 2048
          %216 = vsyncadd [#allocation5], %s215
          %s217 = sshll.u32 [#allocation4], 4
          %s218 = int_to_ptr.vmem [resolvable:$true] %s217
          %223 = dma.hbm_to_vmem [thread:$0]  %s1, 2048, %s218, [#allocation5], 128, 128, 8
        $region16: #{classifier_forward.1} parent=11 // pred_fallthru
          _
        // Predicated region
        $region17: #{classifier_forward.1} parent=11 // pred_check
          %p224 = pneg %p86
        $region18: #{classifier_forward.1} parent=11 // pred_check_branch
          %226 = sbr.rel (%p224) target = $region20
        $region19: #{classifier_forward.1} parent=11 // pred_region
          _
        $region20: #{classifier_forward.1} parent=11 // pred_fallthru
          _
        // Predicated region
        $region21: #{classifier_forward.1} parent=11 // pred_check
          %p227 = pneg %p107
        $region22: #{classifier_forward.1} parent=11 // pred_check_branch
          %229 = sbr.rel (%p227) target = $region24
        $region23: #{classifier_forward.1} parent=11 // pred_region
          %s231 = ssub.s32 2048, 2048
          %232 = vsyncadd [#allocation5], %s231
          %s233 = sshll.u32 [#allocation6], 4
          %s234 = int_to_ptr.vmem [resolvable:$true] %s233
          %239 = dma.hbm_to_vmem [thread:$0]  %s3, 2048, %s234, [#allocation5], 128, 128, 8
        $region24: #{classifier_forward.1} parent=11 // pred_fallthru
          _
        // Predicated region
        $region25: #{classifier_forward.1} parent=11 // pred_check
          %p240 = pneg %p128
        $region26: #{classifier_forward.1} parent=11 // pred_check_branch
          %242 = sbr.rel (%p240) target = $region28
        $region27: #{classifier_forward.1} parent=11 // pred_region
          _
        $region28: #{classifier_forward.1} parent=11 // pred_fallthru
          _
        // Predicated region
        $region29: #{classifier_forward.1} parent=11 // pred_check
          %p243 = pneg %p149
        $region30: #{classifier_forward.1} parent=11 // pred_check_branch
          %245 = sbr.rel (%p243) target = $region32
        $region31: #{classifier_forward.1} parent=11 // pred_region
          %s247 = ssub.s32 2048, 2048
          %248 = vsyncadd [#allocation8], %s247
          %s249 = sshll.u32 [#allocation7], 4
          %s250 = int_to_ptr.vmem [resolvable:$true] %s249
          %255 = dma.hbm_to_vmem [thread:$0]  %s5, 2048, %s250, [#allocation8], 128, 128, 8
        $region32: #{classifier_forward.1} parent=11 // pred_fallthru
          _
        // Predicated region
        $region33: #{classifier_forward.1} parent=11 // pred_check
          %p256 = pneg %p170
        $region34: #{classifier_forward.1} parent=11 // pred_check_branch
          %258 = sbr.rel (%p256) target = $region36
        $region35: #{classifier_forward.1} parent=11 // pred_region
          _
        $region36: #{classifier_forward.1} parent=11 // pred_fallthru
          _
      $region12: #{classifier_forward.1} parent=5 // pred_fallthru
        _
      %p259 = scmp.lt.s32.totalorder %s18, 2
      // Predicated region
      $region37: #{classifier_forward.1} parent=5 // pred_check
        %p260 = pneg %p259
      $region38: #{classifier_forward.1} parent=5 // pred_check_branch
        %262 = sbr.rel (%p260) target = $region40
      $region39: #{classifier_forward.1} parent=5 // pred_region
        // Predicated region
        $region41: #{classifier_forward.1} parent=39 // pred_check
          %p263 = pneg %p38
        $region42: #{classifier_forward.1} parent=39 // pred_check_branch
          %265 = sbr.rel (%p263) target = $region44
        $region43: #{classifier_forward.1} parent=39 // pred_region
          %s266 = sand.u32 %s28, 1
          %s267 = scalar_lea.sflag [#allocation3], %s266
          %s268 = sand.u32 %s28, 1
          %s269 = smul.addr %s268, 32
          %s270 = scalar_lea.vmem [#allocation2], %s269
          %s271 = smul.u32 4, %s18
          %s273 = ssub.s32 512, 512
          %274 = vsyncadd %s267, %s273
          %s275 = smul.addr %s271, 128
          %s276 = scalar_lea.hbm %s0, %s275
          %s277 = sshll.u32 %s270, 4
          %s278 = int_to_ptr.vmem [resolvable:$true] %s277
          %283 = dma.hbm_to_vmem [thread:$0]  %s276, 512, %s278, %s267, 128, 128, 8
        $region44: #{classifier_forward.1} parent=39 // pred_fallthru
          _
      $region40: #{classifier_forward.1} parent=5 // pred_fallthru
        _
      %p284 = scmp.le.s32.totalorder 1, %s18
      %p285 = scmp.lt.s32.totalorder %s18, 3
      %p286 = pnand %p284, %p285
      %p287 = pneg %p286
      // Predicated region
      $region45: #{classifier_forward.1} parent=5 // pred_check
        _
      $region46: #{classifier_forward.1} parent=5 // pred_check_branch
        %289 = sbr.rel (%p286) target = $region48
      $region47: #{classifier_forward.1} parent=5 // pred_region
        %s290 = ssub.s32 %s18, 1
        %s291 = sand.u32 %s31, 1
        %s292 = scalar_lea.sflag [#allocation3], %s291
        %s293 = sand.u32 %s31, 1
        %s294 = smul.addr %s293, 32
        %s295 = scalar_lea.vmem [#allocation2], %s294
        // Predicated region
        $region49: #{classifier_forward.1} parent=47 // pred_check
          %p296 = pneg %p44
        $region50: #{classifier_forward.1} parent=47 // pred_check_branch
          %298 = sbr.rel (%p296) target = $region52
        $region51: #{classifier_forward.1} parent=47 // pred_region
          %299 = dma.done %s292, 512
        $region52: #{classifier_forward.1} parent=47 // pred_fallthru
          _
        // Predicated region
        $region53: #{classifier_forward.1} parent=47 // pred_check
          %p300 = pneg %p65
        $region54: #{classifier_forward.1} parent=47 // pred_check_branch
          %302 = sbr.rel (%p300) target = $region56
        $region55: #{classifier_forward.1} parent=47 // pred_region
          %303 = dma.done [#allocation5], 2048
        $region56: #{classifier_forward.1} parent=47 // pred_fallthru
          _
        // Predicated region
        $region57: #{classifier_forward.1} parent=47 // pred_check
          %p304 = pneg %p107
        $region58: #{classifier_forward.1} parent=47 // pred_check_branch
          %306 = sbr.rel (%p304) target = $region60
        $region59: #{classifier_forward.1} parent=47 // pred_region
          %307 = dma.done [#allocation5], 2048
        $region60: #{classifier_forward.1} parent=47 // pred_fallthru
          _
        // Predicated region
        $region61: #{classifier_forward.1} parent=47 // pred_check
          %p308 = pneg %p149
        $region62: #{classifier_forward.1} parent=47 // pred_check_branch
          %310 = sbr.rel (%p308) target = $region64
        $region63: #{classifier_forward.1} parent=47 // pred_region
          %311 = dma.done [#allocation8], 2048
        $region64: #{classifier_forward.1} parent=47 // pred_fallthru
          _
        %s312 = sand.u32 %s31, 1
        %s313 = scalar_lea.sflag [#allocation3], %s312
        %s314 = sand.u32 %s31, 1
        %s315 = smul.addr %s314, 32
        %s316 = scalar_lea.vmem [#allocation2], %s315
        %p317 = pneg %p44
        %p318 = pneg %p41
        %p319 = pneg %p65
        %p320 = pneg %p62
        %p321 = pneg %p86
        %p322 = pneg %p83
        %p323 = pneg %p107
        %p324 = pneg %p104
        %p325 = pneg %p128
        %p326 = pneg %p125
        %p327 = pneg %p149
        %p328 = pneg %p146
        %p329 = pneg %p170
        %p330 = pneg %p167
        %p331 = pneg %p196
        %p332 = pneg %p193
        %s333 = smul.u32 4, %s23
        %p334 = scmp.lt.s32.totalorder %s333, 7
        %s335 = scalar_select %p334, %s333, 7
        %s336 = smul.addr %s335, 8
        %s337 = scalar_lea.vmem %s7, %s336
        %s338 = smul.u32 4, %s23
        %s339 = smul.u32 4, %s23
        %p340 = scmp.lt.s32.totalorder %s339, 7
        %s341 = scalar_select %p340, %s339, 7
        %s342 = smul.addr %s341, 8
        %s343 = scalar_lea.vmem %s7, %s342
        %s344 = smul.u32 4, %s23
        %v345 = vld [vmem:[%s295] sm:$0xff]
        %v346 = vld [vmem:[%s295 + $0x8] sm:$0xff]
        %v347 = vld [vmem:[%s295 + $0x10] sm:$0xff]
        %v348 = vld [vmem:[%s295 + $0x18] sm:$0xff]
        %v349 = vld [vmem:[#allocation4] sm:$0xff]
        %v350 = vld [vmem:[#allocation4 + $0x8] sm:$0xff]
        %v351 = vld [vmem:[#allocation4 + $0x10] sm:$0xff]
        %v352 = vld [vmem:[#allocation4 + $0x18] sm:$0xff]
        %v353 = vld [vmem:[#allocation4 + $0x20] sm:$0xff]
        %v354 = vld [vmem:[#allocation4 + $0x28] sm:$0xff]
        %v355 = vld [vmem:[#allocation4 + $0x30] sm:$0xff]
        %v356 = vld [vmem:[#allocation4 + $0x38] sm:$0xff]
        %v357 = vld [vmem:[#allocation4 + $0x40] sm:$0xff]
        %v358 = vld [vmem:[#allocation4 + $0x48] sm:$0xff]
        %v359 = vld [vmem:[#allocation4 + $0x50] sm:$0xff]
        %v360 = vld [vmem:[#allocation4 + $0x58] sm:$0xff]
        %v361 = vld [vmem:[#allocation4 + $0x60] sm:$0xff]
        %v362 = vld [vmem:[#allocation4 + $0x68] sm:$0xff]
        %v363 = vld [vmem:[#allocation4 + $0x70] sm:$0xff]
        %v364 = vld [vmem:[#allocation4 + $0x78] sm:$0xff]
        %v365 = vld [vmem:[%s2] sm:$0x1]
        %v367 = vlaneseq
        %v368 = vshrl.u32 %v367, 7
        %v369 = vsub.s32 0, %v368
        %v370 = vrot.slane %v365, %v369
        %372 = vmatprep.subr.mxu0 0.0
        %373 = vmatpush1.msra.mxu0 %v364
        %374 = vmatprep.subr.mxu0 0.0
        %375 = vmatpush1.msra.mxu0 %v363
        %376 = vmatprep.subr.mxu0 0.0
        %377 = vmatpush1.msra.mxu0 %v362
        %378 = vmatprep.subr.mxu0 0.0
        %379 = vmatpush1.msra.mxu0 %v361
        %380 = vmatprep.subr.mxu0 0.0
        %381 = vmatpush1.msra.mxu0 %v360
        %382 = vmatprep.subr.mxu0 0.0
        %383 = vmatpush1.msra.mxu0 %v359
        %384 = vmatprep.subr.mxu0 0.0
        %385 = vmatpush1.msra.mxu0 %v358
        %386 = vmatprep.subr.mxu0 0.0
        %387 = vmatpush1.msra.mxu0 %v357
        %388 = vmatprep.subr.mxu0 0.0
        %389 = vmatpush1.msra.mxu0 %v356
        %390 = vmatprep.subr.mxu0 0.0
        %391 = vmatpush1.msra.mxu0 %v355
        %392 = vmatprep.subr.mxu0 0.0
        %393 = vmatpush1.msra.mxu0 %v354
        %394 = vmatprep.subr.mxu0 0.0
        %395 = vmatpush1.msra.mxu0 %v353
        %396 = vmatprep.subr.mxu0 0.0
        %397 = vmatpush1.msra.mxu0 %v352
        %398 = vmatprep.subr.mxu0 0.0
        %399 = vmatpush1.msra.mxu0 %v351
        %400 = vmatprep.subr.mxu0 0.0
        %401 = vmatpush1.msra.mxu0 %v350
        %402 = vmatprep.subr.mxu0 0.0
        %403 = vmatpush1.msra.mxu0 %v349
        %404 = vmatprep.subr.mxu0 0.0
        %405 = vmatpush2.msra.mxu0 0.0
        %406 = vmatprep.subr.mxu0 0.0
        %407 = vmatpush2.msra.mxu0 0.0
        %408 = vmatprep.subr.mxu0 0.0
        %409 = vmatpush2.msra.mxu0 0.0
        %410 = vmatprep.subr.mxu0 0.0
        %411 = vmatpush2.msra.mxu0 0.0
        %412 = vmatprep.subr.mxu0 0.0
        %413 = vmatpush2.msra.mxu0 0.0
        %414 = vmatprep.subr.mxu0 0.0
        %415 = vmatpush2.msra.mxu0 0.0
        %416 = vmatprep.subr.mxu0 0.0
        %417 = vmatpush2.msra.mxu0 0.0
        %418 = vmatprep.subr.mxu0 0.0
        %419 = vmatpush2.msra.mxu0 0.0
        %420 = vmatprep.subr.mxu0 0.0
        %421 = vmatpush2.msra.mxu0 0.0
        %422 = vmatprep.subr.mxu0 0.0
        %423 = vmatpush2.msra.mxu0 0.0
        %424 = vmatprep.subr.mxu0 0.0
        %425 = vmatpush2.msra.mxu0 0.0
        %426 = vmatprep.subr.mxu0 0.0
        %427 = vmatpush2.msra.mxu0 0.0
        %428 = vmatprep.subr.mxu0 0.0
        %429 = vmatpush2.msra.mxu0 0.0
        %430 = vmatprep.subr.mxu0 0.0
        %431 = vmatpush2.msra.mxu0 0.0
        %432 = vmatprep.subr.mxu0 0.0
        %433 = vmatpush2.msra.mxu0 0.0
        %434 = vmatprep.subr.mxu0 0.0
        %435 = vmatpush2.msra.mxu0 0.0
        %436 = vmatprep.mubr.f32.mxu0 0.0
        %437 = vmatmul.mubr.f32.gmra.mxu0 %v345
        %v438 = vpop.f32.mrf.mxu0
        %v439 = vadd.f32 %v370, %v438
        %v440 = vpop.f32.mrf.mxu0
        %441 = vmatprep.mubr.f32.mxu0 0.0
        %442 = vmatmul.mubr.f32.gmra.mxu0 %v346
        %v443 = vpop.f32.mrf.mxu0
        %v444 = vadd.f32 %v370, %v443
        %v445 = vpop.f32.mrf.mxu0
        %446 = vmatprep.mubr.f32.mxu0 0.0
        %447 = vmatmul.mubr.f32.gmra.mxu0 %v347
        %v448 = vpop.f32.mrf.mxu0
        %v449 = vadd.f32 %v370, %v448
        %v450 = vpop.f32.mrf.mxu0
        %451 = vmatprep.mubr.f32.mxu0 0.0
        %452 = vmatmul.mubr.f32.gmra.mxu0 %v348
        %v453 = vpop.f32.mrf.mxu0
        %v454 = vadd.f32 %v370, %v453
        %v455 = vpop.f32.mrf.mxu0
        %456 = vdwg.mxu0
        %v457 = vmax.f32 %v439, 0.0
        %v458 = vmax.f32 %v444, 0.0
        %v459 = vmax.f32 %v449, 0.0
        %v460 = vmax.f32 %v454, 0.0
        %v461 = vld [vmem:[#allocation6] sm:$0xff]
        %v462 = vld [vmem:[#allocation6 + $0x8] sm:$0xff]
        %v463 = vld [vmem:[#allocation6 + $0x10] sm:$0xff]
        %v464 = vld [vmem:[#allocation6 + $0x18] sm:$0xff]
        %v465 = vld [vmem:[#allocation6 + $0x20] sm:$0xff]
        %v466 = vld [vmem:[#allocation6 + $0x28] sm:$0xff]
        %v467 = vld [vmem:[#allocation6 + $0x30] sm:$0xff]
        %v468 = vld [vmem:[#allocation6 + $0x38] sm:$0xff]
        %v469 = vld [vmem:[#allocation6 + $0x40] sm:$0xff]
        %v470 = vld [vmem:[#allocation6 + $0x48] sm:$0xff]
        %v471 = vld [vmem:[#allocation6 + $0x50] sm:$0xff]
        %v472 = vld [vmem:[#allocation6 + $0x58] sm:$0xff]
        %v473 = vld [vmem:[#allocation6 + $0x60] sm:$0xff]
        %v474 = vld [vmem:[#allocation6 + $0x68] sm:$0xff]
        %v475 = vld [vmem:[#allocation6 + $0x70] sm:$0xff]
        %v476 = vld [vmem:[#allocation6 + $0x78] sm:$0xff]
        %v477 = vld [vmem:[%s4] sm:$0x1]
        %v479 = vlaneseq
        %v480 = vshrl.u32 %v479, 7
        %v481 = vsub.s32 0, %v480
        %v482 = vrot.slane %v477, %v481
        %484 = vmatprep.subr.mxu0 0.0
        %485 = vmatpush1.msra.mxu0 %v476
        %486 = vmatprep.subr.mxu0 0.0
        %487 = vmatpush1.msra.mxu0 %v475
        %488 = vmatprep.subr.mxu0 0.0
        %489 = vmatpush1.msra.mxu0 %v474
        %490 = vmatprep.subr.mxu0 0.0
        %491 = vmatpush1.msra.mxu0 %v473
        %492 = vmatprep.subr.mxu0 0.0
        %493 = vmatpush1.msra.mxu0 %v472
        %494 = vmatprep.subr.mxu0 0.0
        %495 = vmatpush1.msra.mxu0 %v471
        %496 = vmatprep.subr.mxu0 0.0
        %497 = vmatpush1.msra.mxu0 %v470
        %498 = vmatprep.subr.mxu0 0.0
        %499 = vmatpush1.msra.mxu0 %v469
        %500 = vmatprep.subr.mxu0 0.0
        %501 = vmatpush1.msra.mxu0 %v468
        %502 = vmatprep.subr.mxu0 0.0
        %503 = vmatpush1.msra.mxu0 %v467
        %504 = vmatprep.subr.mxu0 0.0
        %505 = vmatpush1.msra.mxu0 %v466
        %506 = vmatprep.subr.mxu0 0.0
        %507 = vmatpush1.msra.mxu0 %v465
        %508 = vmatprep.subr.mxu0 0.0
        %509 = vmatpush1.msra.mxu0 %v464
        %510 = vmatprep.subr.mxu0 0.0
        %511 = vmatpush1.msra.mxu0 %v463
        %512 = vmatprep.subr.mxu0 0.0
        %513 = vmatpush1.msra.mxu0 %v462
        %514 = vmatprep.subr.mxu0 0.0
        %515 = vmatpush1.msra.mxu0 %v461
        %516 = vmatprep.subr.mxu0 0.0
        %517 = vmatpush2.msra.mxu0 0.0
        %518 = vmatprep.subr.mxu0 0.0
        %519 = vmatpush2.msra.mxu0 0.0
        %520 = vmatprep.subr.mxu0 0.0
        %521 = vmatpush2.msra.mxu0 0.0
        %522 = vmatprep.subr.mxu0 0.0
        %523 = vmatpush2.msra.mxu0 0.0
        %524 = vmatprep.subr.mxu0 0.0
        %525 = vmatpush2.msra.mxu0 0.0
        %526 = vmatprep.subr.mxu0 0.0
        %527 = vmatpush2.msra.mxu0 0.0
        %528 = vmatprep.subr.mxu0 0.0
        %529 = vmatpush2.msra.mxu0 0.0
        %530 = vmatprep.subr.mxu0 0.0
        %531 = vmatpush2.msra.mxu0 0.0
        %532 = vmatprep.subr.mxu0 0.0
        %533 = vmatpush2.msra.mxu0 0.0
        %534 = vmatprep.subr.mxu0 0.0
        %535 = vmatpush2.msra.mxu0 0.0
        %536 = vmatprep.subr.mxu0 0.0
        %537 = vmatpush2.msra.mxu0 0.0
        %538 = vmatprep.subr.mxu0 0.0
        %539 = vmatpush2.msra.mxu0 0.0
        %540 = vmatprep.subr.mxu0 0.0
        %541 = vmatpush2.msra.mxu0 0.0
        %542 = vmatprep.subr.mxu0 0.0
        %543 = vmatpush2.msra.mxu0 0.0
        %544 = vmatprep.subr.mxu0 0.0
        %545 = vmatpush2.msra.mxu0 0.0
        %546 = vmatprep.subr.mxu0 0.0
        %547 = vmatpush2.msra.mxu0 0.0
        %548 = vmatprep.mubr.f32.mxu0 0.0
        %549 = vmatmul.mubr.f32.gmra.mxu0 %v457
        %v550 = vpop.f32.mrf.mxu0
        %v551 = vadd.f32 %v482, %v550
        %v552 = vpop.f32.mrf.mxu0
        %553 = vmatprep.mubr.f32.mxu0 0.0
        %554 = vmatmul.mubr.f32.gmra.mxu0 %v458
        %v555 = vpop.f32.mrf.mxu0
        %v556 = vadd.f32 %v482, %v555
        %v557 = vpop.f32.mrf.mxu0
        %558 = vmatprep.mubr.f32.mxu0 0.0
        %559 = vmatmul.mubr.f32.gmra.mxu0 %v459
        %v560 = vpop.f32.mrf.mxu0
        %v561 = vadd.f32 %v482, %v560
        %v562 = vpop.f32.mrf.mxu0
        %563 = vmatprep.mubr.f32.mxu0 0.0
        %564 = vmatmul.mubr.f32.gmra.mxu0 %v460
        %v565 = vpop.f32.mrf.mxu0
        %v566 = vadd.f32 %v482, %v565
        %v567 = vpop.f32.mrf.mxu0
        %568 = vdwg.mxu0
        %v569 = vmax.f32 %v551, 0.0
        %v570 = vmax.f32 %v556, 0.0
        %v571 = vmax.f32 %v561, 0.0
        %v572 = vmax.f32 %v566, 0.0
        %v573 = vld [vmem:[#allocation7] sm:$0xff]
        %v574 = vld [vmem:[#allocation7 + $0x8] sm:$0xff]
        %v575 = vld [vmem:[#allocation7 + $0x10] sm:$0xff]
        %v576 = vld [vmem:[#allocation7 + $0x18] sm:$0xff]
        %v577 = vld [vmem:[#allocation7 + $0x20] sm:$0xff]
        %v578 = vld [vmem:[#allocation7 + $0x28] sm:$0xff]
        %v579 = vld [vmem:[#allocation7 + $0x30] sm:$0xff]
        %v580 = vld [vmem:[#allocation7 + $0x38] sm:$0xff]
        %v581 = vld [vmem:[#allocation7 + $0x40] sm:$0xff]
        %v582 = vld [vmem:[#allocation7 + $0x48] sm:$0xff]
        %v583 = vld [vmem:[#allocation7 + $0x50] sm:$0xff]
        %v584 = vld [vmem:[#allocation7 + $0x58] sm:$0xff]
        %v585 = vld [vmem:[#allocation7 + $0x60] sm:$0xff]
        %v586 = vld [vmem:[#allocation7 + $0x68] sm:$0xff]
        %v587 = vld [vmem:[#allocation7 + $0x70] sm:$0xff]
        %v588 = vld [vmem:[#allocation7 + $0x78] sm:$0xff]
        %v589 = vld [vmem:[%s6] sm:$0x1]
        %v591 = vlaneseq
        %v592 = vshrl.u32 %v591, 7
        %v593 = vsub.s32 0, %v592
        %v594 = vrot.slane %v589, %v593
        %596 = vmatprep.subr.mxu0 0.0
        %597 = vmatpush1.msra.mxu0 %v588
        %598 = vmatprep.subr.mxu0 0.0
        %599 = vmatpush1.msra.mxu0 %v587
        %600 = vmatprep.subr.mxu0 0.0
        %601 = vmatpush1.msra.mxu0 %v586
        %602 = vmatprep.subr.mxu0 0.0
        %603 = vmatpush1.msra.mxu0 %v585
        %604 = vmatprep.subr.mxu0 0.0
        %605 = vmatpush1.msra.mxu0 %v584
        %606 = vmatprep.subr.mxu0 0.0
        %607 = vmatpush1.msra.mxu0 %v583
        %608 = vmatprep.subr.mxu0 0.0
        %609 = vmatpush1.msra.mxu0 %v582
        %610 = vmatprep.subr.mxu0 0.0
        %611 = vmatpush1.msra.mxu0 %v581
        %612 = vmatprep.subr.mxu0 0.0
        %613 = vmatpush1.msra.mxu0 %v580
        %614 = vmatprep.subr.mxu0 0.0
        %615 = vmatpush1.msra.mxu0 %v579
        %616 = vmatprep.subr.mxu0 0.0
        %617 = vmatpush1.msra.mxu0 %v578
        %618 = vmatprep.subr.mxu0 0.0
        %619 = vmatpush1.msra.mxu0 %v577
        %620 = vmatprep.subr.mxu0 0.0
        %621 = vmatpush1.msra.mxu0 %v576
        %622 = vmatprep.subr.mxu0 0.0
        %623 = vmatpush1.msra.mxu0 %v575
        %624 = vmatprep.subr.mxu0 0.0
        %625 = vmatpush1.msra.mxu0 %v574
        %626 = vmatprep.subr.mxu0 0.0
        %627 = vmatpush1.msra.mxu0 %v573
        %628 = vmatprep.subr.mxu0 0.0
        %629 = vmatpush2.msra.mxu0 0.0
        %630 = vmatprep.subr.mxu0 0.0
        %631 = vmatpush2.msra.mxu0 0.0
        %632 = vmatprep.subr.mxu0 0.0
        %633 = vmatpush2.msra.mxu0 0.0
        %634 = vmatprep.subr.mxu0 0.0
        %635 = vmatpush2.msra.mxu0 0.0
        %636 = vmatprep.subr.mxu0 0.0
        %637 = vmatpush2.msra.mxu0 0.0
        %638 = vmatprep.subr.mxu0 0.0
        %639 = vmatpush2.msra.mxu0 0.0
        %640 = vmatprep.subr.mxu0 0.0
        %641 = vmatpush2.msra.mxu0 0.0
        %642 = vmatprep.subr.mxu0 0.0
        %643 = vmatpush2.msra.mxu0 0.0
        %644 = vmatprep.subr.mxu0 0.0
        %645 = vmatpush2.msra.mxu0 0.0
        %646 = vmatprep.subr.mxu0 0.0
        %647 = vmatpush2.msra.mxu0 0.0
        %648 = vmatprep.subr.mxu0 0.0
        %649 = vmatpush2.msra.mxu0 0.0
        %650 = vmatprep.subr.mxu0 0.0
        %651 = vmatpush2.msra.mxu0 0.0
        %652 = vmatprep.subr.mxu0 0.0
        %653 = vmatpush2.msra.mxu0 0.0
        %654 = vmatprep.subr.mxu0 0.0
        %655 = vmatpush2.msra.mxu0 0.0
        %656 = vmatprep.subr.mxu0 0.0
        %657 = vmatpush2.msra.mxu0 0.0
        %658 = vmatprep.subr.mxu0 0.0
        %659 = vmatpush2.msra.mxu0 0.0
        %660 = vmatprep.mubr.f32.mxu0 0.0
        %661 = vmatmul.mubr.f32.gmra.mxu0 %v569
        %v662 = vpop.f32.mrf.mxu0
        %v663 = vadd.f32 %v594, %v662
        %v664 = vpop.f32.mrf.mxu0
        %665 = vmatprep.mubr.f32.mxu0 0.0
        %666 = vmatmul.mubr.f32.gmra.mxu0 %v570
        %v667 = vpop.f32.mrf.mxu0
        %v668 = vadd.f32 %v594, %v667
        %v669 = vpop.f32.mrf.mxu0
        %670 = vmatprep.mubr.f32.mxu0 0.0
        %671 = vmatmul.mubr.f32.gmra.mxu0 %v571
        %v672 = vpop.f32.mrf.mxu0
        %v673 = vadd.f32 %v594, %v672
        %v674 = vpop.f32.mrf.mxu0
        %675 = vmatprep.mubr.f32.mxu0 0.0
        %676 = vmatmul.mubr.f32.gmra.mxu0 %v572
        %v677 = vpop.f32.mrf.mxu0
        %v678 = vadd.f32 %v594, %v677
        %v679 = vpop.f32.mrf.mxu0
        %680 = vdwg.mxu0
        %681 = vst [vmem:[%s343] sm:$0xff] %v663
        %682 = vst [vmem:[%s343 + $0x8] sm:$0xff] %v668
        %683 = vst [vmem:[%s343 + $0x10] sm:$0xff] %v673
        %684 = vst [vmem:[%s343 + $0x18] sm:$0xff] %v678
        %s685 = smul.u32 4, %s23
        %p686 = scmp.lt.s32.totalorder %s685, 7
        %s687 = scalar_select %p686, %s685, 7
        %s688 = smul.addr %s687, 8
        %s689 = scalar_lea.vmem %s7, %s688
        // Predicated region
        $region65: #{classifier_forward.1} parent=47 // pred_check
          %p690 = pneg %p193
        $region66: #{classifier_forward.1} parent=47 // pred_check_branch
          %692 = sbr.rel (%p690) target = $region68
        $region67: #{classifier_forward.1} parent=47 // pred_region
          %s693 = smul.u32 4, %s23
        $region68: #{classifier_forward.1} parent=47 // pred_fallthru
          _
      $region48: #{classifier_forward.1} parent=5 // pred_fallthru
        _
      %p694 = scmp.le.s32.totalorder 2, %s18
      // Predicated region
      $region69: #{classifier_forward.1} parent=5 // pred_check
        %p695 = pneg %p694
      $region70: #{classifier_forward.1} parent=5 // pred_check_branch
        %697 = sbr.rel (%p695) target = $region72
      $region71: #{classifier_forward.1} parent=5 // pred_region
        %s698 = ssub.s32 %s18, 2
        // Predicated region
        $region73: #{classifier_forward.1} parent=71 // pred_check
          %p699 = pneg %p199
        $region74: #{classifier_forward.1} parent=71 // pred_check_branch
          %701 = sbr.rel (%p699) target = $region76
        $region75: #{classifier_forward.1} parent=71 // pred_region
          %s702 = smul.u32 4, %s24
          %p703 = scmp.lt.s32.totalorder %s702, 7
          %s704 = scalar_select %p703, %s702, 7
          %s705 = smul.addr %s704, 8
          %s706 = scalar_lea.vmem %s7, %s705
        $region76: #{classifier_forward.1} parent=71 // pred_fallthru
          _
      $region72: #{classifier_forward.1} parent=5 // pred_fallthru
        _
    $region6: #{classifier_forward.1} parent=1 // loop_footer
      %s22 = sadd.s32 1, %s18
    $region7: #{classifier_forward.1} parent=1 // loop_footer_branch
      %17 = sbr.rel target = $region3
    $region8: #{classifier_forward.1} parent=1 // loop_exit
      _
    %707 = vsyncpa [#allocation3], 1
    %s708 = scalar_lea.sflag [#allocation3], 1
    %709 = vsyncpa %s708, 1
    %710 = vsyncpa [#allocation5], 1
    %711 = vsyncpa [#allocation8], 1

</llo_original>
